<compile_context>
chip_gen: v5e
topology: v5e:2x2
jax: 0.10.0
libtpu: 0.0.40
codegen_flags: <defaults>
</compile_context>

<pallas_src>
import functools

import jax
import jax.numpy as jnp
import numpy as np
from jax import lax
from jax.experimental import pallas as pl
from jax.experimental.pallas import tpu as pltpu


def _round_up(v, mult):
    return ((v + mult - 1) // mult) * mult


def _ahd_kernel(x_ref, y_ref, out_ref,
                row_min_ref, col_min_ref, acc_row_ref, acc_col_ref,
                *, n, m, tn, tm):
    i = pl.program_id(0)              # N-tile index (outer)
    j = pl.program_id(1)              # M-tile index (inner, reduction for dis_1)
    ni = pl.num_programs(0)
    nj = pl.num_programs(1)

    @pl.when(jnp.logical_and(i == 0, j == 0))
    def _():
        acc_row_ref[...] = jnp.zeros_like(acc_row_ref)
        acc_col_ref[...] = jnp.zeros_like(acc_col_ref)

    x = x_ref[...].astype(jnp.float32)            # (tn, Dp)
    y = y_ref[...].astype(jnp.float32)            # (tm, Dp)

    # Pairwise squared distances: ||x||^2 + ||y||^2 - 2 <x, y>  (MXU for <x,y>).
    x_sq = jnp.sum(x * x, axis=-1, keepdims=True)                 # (tn, 1)
    y_sq = jnp.sum(y * y, axis=-1, keepdims=True)                 # (tm, 1)
    xy = lax.dot_general(x, y,
                         dimension_numbers=(((1,), (1,)), ((), ())),
                         preferred_element_type=jnp.float32)      # (tn, tm)
    sq = x_sq + y_sq.T - 2.0 * xy                                 # (tn, tm)

    # Validity masks for zero-padded rows of X / rows of Y (cols of sq).
    row_ids = lax.broadcasted_iota(jnp.int32, (tn, 1), 0) + i * tn
    col_ids = lax.broadcasted_iota(jnp.int32, (1, tm), 1) + j * tm
    valid_row = row_ids < n                                       # (tn, 1)
    valid_col = col_ids < m                                       # (1, tm)

    inf = jnp.float32(jnp.inf)
    row_min_tile = jnp.min(jnp.where(valid_col, sq, inf), axis=1, keepdims=True)  # (tn,1)
    col_min_tile = jnp.min(jnp.where(valid_row, sq, inf), axis=0, keepdims=True)  # (1,tm)

    # Running row-min for this N tile, carried across the (inner) M axis.
    @pl.when(j == 0)
    def _():
        row_min_ref[...] = jnp.full_like(row_min_ref, inf)
    row_min_ref[...] = jnp.minimum(row_min_ref[...], row_min_tile)

    # Running col-min for this M tile, carried across the (outer) N axis.
    @pl.when(i == 0)
    def _():
        col_min_ref[j] = jnp.full((1, tm), inf, jnp.float32)
    col_min_ref[j] = jnp.minimum(col_min_ref[j], col_min_tile)

    # dis_1 contribution: rows of this N tile complete after the last M tile.
    @pl.when(j == nj - 1)
    def _():
        d = jnp.sqrt(jnp.maximum(row_min_ref[...], 0.0))
        d = jnp.where(valid_row, d, 0.0)
        acc_row_ref[...] = acc_row_ref[...] + jnp.sum(d, keepdims=True)

    # dis_2 contribution: cols of this M tile complete after the last N tile.
    @pl.when(i == ni - 1)
    def _():
        d = jnp.sqrt(jnp.maximum(col_min_ref[j], 0.0))
        d = jnp.where(valid_col, d, 0.0)
        acc_col_ref[...] = acc_col_ref[...] + jnp.sum(d, keepdims=True)

    @pl.when(jnp.logical_and(i == ni - 1, j == nj - 1))
    def _():
        out_ref[...] = (acc_row_ref[...] * jnp.float32(1.0 / n)
                        + acc_col_ref[...] * jnp.float32(1.0 / m))


def ahd_loss(x, y, *, tile_n=None, tile_m=None):
    """x: (N, D), y: (M, D) -> scalar f32 AHD loss."""
    n, d = x.shape
    m, d2 = y.shape
    assert d == d2

    # Feature (lane) axis padded to a multiple of 128; zero padding leaves every
    # pairwise distance unchanged.
    d_pad = _round_up(d, 128)

    # Tile sizes: multiples of 8 on the sublane axis, capped so double-buffered
    # input tiles stay small enough for every generation's default scoped VMEM
    # (incl. v7x: 64 MiB physical / 32 MiB scoped).
    budget_rows = max(8, ((2 * 1024 * 1024) // (d_pad * 4)) // 8 * 8)
    tn = tile_n if tile_n is not None else min(_round_up(n, 8), 512, budget_rows)
    tm = tile_m if tile_m is not None else min(_round_up(m, 8), 512, budget_rows)
    n_pad = _round_up(n, tn)
    m_pad = _round_up(m, tm)
    ni = n_pad // tn
    nj = m_pad // tm

    xp = jnp.zeros((n_pad, d_pad), jnp.float32).at[:n, :d].set(x.astype(jnp.float32))
    yp = jnp.zeros((m_pad, d_pad), jnp.float32).at[:m, :d].set(y.astype(jnp.float32))

    kernel = functools.partial(_ahd_kernel, n=n, m=m, tn=tn, tm=tm)

    out = pl.pallas_call(
        kernel,
        out_shape=jax.ShapeDtypeStruct((1, 1), jnp.float32),
        grid_spec=pltpu.PrefetchScalarGridSpec(
            num_scalar_prefetch=0,
            grid=(ni, nj),
            in_specs=[
                pl.BlockSpec((tn, d_pad), lambda i, j: (i, 0)),
                pl.BlockSpec((tm, d_pad), lambda i, j: (j, 0)),
            ],
            out_specs=pl.BlockSpec((1, 1), lambda i, j: (0, 0)),
            scratch_shapes=[
                pltpu.VMEM((tn, 1), jnp.float32),       # running row-min (current N tile)
                pltpu.VMEM((nj, 1, tm), jnp.float32),   # running col-min per M tile
                pltpu.VMEM((1, 1), jnp.float32),        # sum of sqrt(row mins)
                pltpu.VMEM((1, 1), jnp.float32),        # sum of sqrt(col mins)
            ],
        ),
        compiler_params=pltpu.CompilerParams(
            # Both grid axes carry accumulator state (row mins across j, col mins
            # across i), so they must stay "arbitrary".
            dimension_semantics=("arbitrary", "arbitrary"),
            vmem_limit_bytes=32 * 1024 * 1024,
        ),
    )(xp, yp)
    return out[0, 0]


def _reference(x, y):
    # Pure-JAX reference mirroring the PyTorch loops exactly.
    diff = x[:, None, :] - y[None, :, :]
    dist = jnp.sqrt(jnp.sum(diff * diff, axis=-1))
    return jnp.mean(jnp.min(dist, axis=1)) + jnp.mean(jnp.min(dist, axis=0))


if __name__ == "__main__":
    key = jax.random.PRNGKey(0)
    kx, ky, kx2, ky2 = jax.random.split(key, 4)

    # Case 1: the module's natural small shapes (single tile, padded D).
    X = jax.random.normal(kx, (8, 32), dtype=jnp.float32)
    Y = jax.random.normal(ky, (16, 32), dtype=jnp.float32)
    loss = jax.block_until_ready(ahd_loss(X, Y))
    ref = jax.block_until_ready(_reference(X, Y))
    np.testing.assert_allclose(np.asarray(loss), np.asarray(ref), rtol=1e-4, atol=1e-4)

    # Case 2: multi-tile path with padding on every axis (forced small tiles).
    X2 = jax.random.normal(kx2, (40, 50), dtype=jnp.float32)
    Y2 = jax.random.normal(ky2, (20, 50), dtype=jnp.float32)
    loss2 = jax.block_until_ready(ahd_loss(X2, Y2, tile_n=16, tile_m=8))
    ref2 = jax.block_until_ready(_reference(X2, Y2))
    np.testing.assert_allclose(np.asarray(loss2), np.asarray(ref2), rtol=1e-4, atol=1e-4)

    print("KERNEL_OK")
</pallas_src>

<mosaic_0001>
module attributes {stable_mosaic.version = 11 : i64} {
  func.func @_ahd_kernel(%arg0: i32, %arg1: i32, %arg2: memref<8x128xf32, #tpu.memory_space<vmem>>, %arg3: memref<16x128xf32, #tpu.memory_space<vmem>>, %arg4: memref<1x1xf32, #tpu.memory_space<vmem>>, %arg5: memref<8x1xf32, #tpu.memory_space<vmem>>, %arg6: memref<1x1x16xf32, #tpu.memory_space<vmem>>, %arg7: memref<1x1xf32, #tpu.memory_space<vmem>>, %arg8: memref<1x1xf32, #tpu.memory_space<vmem>>) attributes {dimension_semantics = [#tpu.dimension_semantics<arbitrary>, #tpu.dimension_semantics<arbitrary>], iteration_bounds = array<i64: 1, 1>, scalar_prefetch = 0 : i64, scratch_operands = 4 : i64, tpu.core_type = #tpu.core_type<tc>, window_params = [{transform_indices = @transform_0, window_bounds = array<i64: 8, 128>}, {transform_indices = @transform_1, window_bounds = array<i64: 16, 128>}, {pipeline_mode = #tpu.pipeline_mode<synchronous>, transform_indices = @transform_2, window_bounds = array<i64: 1, 1>}]} {
    %c0_i32 = arith.constant 0 : i32
    %0 = arith.cmpi eq, %arg0, %c0_i32 : i32
    %c0_i32_0 = arith.constant 0 : i32
    %1 = arith.cmpi eq, %arg1, %c0_i32_0 : i32
    %2 = arith.andi %0, %1 : i1
    %3 = arith.extui %2 : i1 to i32
    %c0_i32_1 = arith.constant 0 : i32
    %4 = arith.cmpi ne, %3, %c0_i32_1 : i32
    scf.if %4 {
      %cst_35 = arith.constant 0.000000e+00 : f32
      %73 = vector.broadcast %cst_35 : f32 to vector<1x1xf32>
      %c0_36 = arith.constant 0 : index
      %c0_37 = arith.constant 0 : index
      %74 = vector.load %arg7[%c0_36, %c0_37] : memref<1x1xf32, #tpu.memory_space<vmem>>, vector<1x1xf32>
      tpu.vector_store %arg7[%c0_36, %c0_37], %73 {strides = array<i32>} : memref<1x1xf32, #tpu.memory_space<vmem>>, vector<1x1xf32>,
      %cst_38 = arith.constant 0.000000e+00 : f32
      %75 = vector.broadcast %cst_38 : f32 to vector<1x1xf32>
      %c0_39 = arith.constant 0 : index
      %c0_40 = arith.constant 0 : index
      %76 = vector.load %arg8[%c0_39, %c0_40] : memref<1x1xf32, #tpu.memory_space<vmem>>, vector<1x1xf32>
      tpu.vector_store %arg8[%c0_39, %c0_40], %75 {strides = array<i32>} : memref<1x1xf32, #tpu.memory_space<vmem>>, vector<1x1xf32>,
    } else {
    }
    %c0 = arith.constant 0 : index
    %c0_2 = arith.constant 0 : index
    %5 = vector.load %arg2[%c0, %c0_2] : memref<8x128xf32, #tpu.memory_space<vmem>>, vector<8x128xf32>
    %c0_3 = arith.constant 0 : index
    %c0_4 = arith.constant 0 : index
    %6 = vector.load %arg3[%c0_3, %c0_4] : memref<16x128xf32, #tpu.memory_space<vmem>>, vector<16x128xf32>
    %7 = arith.mulf %5, %5 : vector<8x128xf32>
    %cst = arith.constant dense<0.000000e+00> : vector<8xf32>
    %8 = vector.multi_reduction <add>, %7, %cst [1] : vector<8x128xf32> to vector<8xf32>
    %9 = vector.shape_cast %8 : vector<8xf32> to vector<8x1xf32>
    %10 = arith.mulf %6, %6 : vector<16x128xf32>
    %cst_5 = arith.constant dense<0.000000e+00> : vector<16xf32>
    %11 = vector.multi_reduction <add>, %10, %cst_5 [1] : vector<16x128xf32> to vector<16xf32>
    %12 = vector.shape_cast %11 : vector<16xf32> to vector<16x1xf32>
    %cst_6 = arith.constant dense<0.000000e+00> : vector<8x16xf32>
    %13 = tpu.matmul %5, %6, %cst_6 {dimension_numbers = #tpu.dot_dimension_numbers<[1], [1], [0], [0], [0, 0, 1, 0], [], []>} : vector<8x128xf32>, vector<16x128xf32>, vector<8x16xf32> -> vector<8x16xf32>
    %14 = tpu.transpose %12, [1, 0] : vector<16x1xf32> -> vector<1x16xf32>
    %15 = vector.broadcast %9 : vector<8x1xf32> to vector<8x16xf32>
    %16 = vector.broadcast %14 : vector<1x16xf32> to vector<8x16xf32>
    %17 = arith.addf %15, %16 : vector<8x16xf32>
    %cst_7 = arith.constant 2.000000e+00 : f32
    %18 = vector.broadcast %cst_7 : f32 to vector<8x16xf32>
    %19 = arith.mulf %18, %13 : vector<8x16xf32>
    %20 = arith.subf %17, %19 : vector<8x16xf32>
    %21 = tpu.iota {dimensions = array<i32: 0>} : vector<8x1xi32>
    %c8_i32 = arith.constant 8 : i32
    %22 = arith.muli %arg0, %c8_i32 : i32
    %23 = vector.broadcast %22 : i32 to vector<8x1xi32>
    %24 = arith.addi %21, %23 : vector<8x1xi32>
    %25 = tpu.iota {dimensions = array<i32: 1>} : vector<1x16xi32>
    %c16_i32 = arith.constant 16 : i32
    %26 = arith.muli %arg1, %c16_i32 : i32
    %27 = vector.broadcast %26 : i32 to vector<1x16xi32>
    %28 = arith.addi %25, %27 : vector<1x16xi32>
    %c8_i32_8 = arith.constant 8 : i32
    %29 = vector.broadcast %c8_i32_8 : i32 to vector<8x1xi32>
    %30 = arith.cmpi slt, %24, %29 : vector<8x1xi32>
    %c16_i32_9 = arith.constant 16 : i32
    %31 = vector.broadcast %c16_i32_9 : i32 to vector<1x16xi32>
    %32 = arith.cmpi slt, %28, %31 : vector<1x16xi32>
    %cst_10 = arith.constant 0x7F800000 : f32
    %33 = vector.shape_cast %32 : vector<1x16xi1> to vector<1x16xi1>
    %34 = vector.broadcast %33 : vector<1x16xi1> to vector<8x16xi1>
    %35 = vector.broadcast %cst_10 : f32 to vector<8x16xf32>
    %36 = arith.select %34, %20, %35 : vector<8x16xi1>, vector<8x16xf32>
    %cst_11 = arith.constant dense<0x7F800000> : vector<8xf32>
    %37 = vector.multi_reduction <minimumf>, %36, %cst_11 [1] : vector<8x16xf32> to vector<8xf32>
    %38 = vector.shape_cast %37 : vector<8xf32> to vector<8x1xf32>
    %cst_12 = arith.constant 0x7F800000 : f32
    %39 = vector.shape_cast %30 : vector<8x1xi1> to vector<8x1xi1>
    %40 = vector.broadcast %39 : vector<8x1xi1> to vector<8x16xi1>
    %41 = vector.broadcast %cst_12 : f32 to vector<8x16xf32>
    %42 = arith.select %40, %20, %41 : vector<8x16xi1>, vector<8x16xf32>
    %cst_13 = arith.constant dense<0x7F800000> : vector<16xf32>
    %43 = vector.multi_reduction <minimumf>, %42, %cst_13 [0] : vector<8x16xf32> to vector<16xf32>
    %44 = vector.shape_cast %43 : vector<16xf32> to vector<1x16xf32>
    %c0_i32_14 = arith.constant 0 : i32
    %45 = arith.cmpi eq, %arg1, %c0_i32_14 : i32
    %46 = arith.extui %45 : i1 to i32
    %cst_15 = arith.constant 0x7F800000 : f32
    %c0_i32_16 = arith.constant 0 : i32
    %47 = arith.cmpi ne, %46, %c0_i32_16 : i32
    scf.if %47 {
      %73 = vector.broadcast %cst_15 : f32 to vector<8x1xf32>
      %c0_35 = arith.constant 0 : index
      %c0_36 = arith.constant 0 : index
      %74 = vector.load %arg5[%c0_35, %c0_36] : memref<8x1xf32, #tpu.memory_space<vmem>>, vector<8x1xf32>
      tpu.vector_store %arg5[%c0_35, %c0_36], %73 {strides = array<i32>} : memref<8x1xf32, #tpu.memory_space<vmem>>, vector<8x1xf32>,
    } else {
    }
    %c0_17 = arith.constant 0 : index
    %c0_18 = arith.constant 0 : index
    %48 = vector.load %arg5[%c0_17, %c0_18] : memref<8x1xf32, #tpu.memory_space<vmem>>, vector<8x1xf32>
    %49 = arith.minimumf %48, %38 : vector<8x1xf32>
    %c0_19 = arith.constant 0 : index
    %c0_20 = arith.constant 0 : index
    %50 = vector.load %arg5[%c0_19, %c0_20] : memref<8x1xf32, #tpu.memory_space<vmem>>, vector<8x1xf32>
    tpu.vector_store %arg5[%c0_19, %c0_20], %49 {strides = array<i32>} : memref<8x1xf32, #tpu.memory_space<vmem>>, vector<8x1xf32>,
    %c0_i32_21 = arith.constant 0 : i32
    %51 = arith.cmpi eq, %arg0, %c0_i32_21 : i32
    %52 = arith.extui %51 : i1 to i32
    %cst_22 = arith.constant 0x7F800000 : f32
    %c0_i32_23 = arith.constant 0 : i32
    %53 = arith.cmpi ne, %52, %c0_i32_23 : i32
    scf.if %53 {
      %73 = vector.broadcast %cst_22 : f32 to vector<1x16xf32>
      %74 = arith.index_cast %arg1 : i32 to index
      %c0_35 = arith.constant 0 : index
      %c0_36 = arith.constant 0 : index
      %75 = vector.load %arg6[%74, %c0_35, %c0_36] : memref<1x1x16xf32, #tpu.memory_space<vmem>>, vector<1x1x16xf32>
      %76 = vector.shape_cast %75 : vector<1x1x16xf32> to vector<1x16xf32>
      %77 = vector.shape_cast %73 : vector<1x16xf32> to vector<1x1x16xf32>
      tpu.vector_store %arg6[%74, %c0_35, %c0_36], %77 {strides = array<i32>} : memref<1x1x16xf32, #tpu.memory_space<vmem>>, vector<1x1x16xf32>,
    } else {
    }
    %54 = arith.index_cast %arg1 : i32 to index
    %c0_24 = arith.constant 0 : index
    %c0_25 = arith.constant 0 : index
    %55 = vector.load %arg6[%54, %c0_24, %c0_25] : memref<1x1x16xf32, #tpu.memory_space<vmem>>, vector<1x1x16xf32>
    %56 = vector.shape_cast %55 : vector<1x1x16xf32> to vector<1x16xf32>
    %57 = arith.minimumf %56, %44 : vector<1x16xf32>
    %58 = arith.index_cast %arg1 : i32 to index
    %c0_26 = arith.constant 0 : index
    %c0_27 = arith.constant 0 : index
    %59 = vector.load %arg6[%58, %c0_26, %c0_27] : memref<1x1x16xf32, #tpu.memory_space<vmem>>, vector<1x1x16xf32>
    %60 = vector.shape_cast %59 : vector<1x1x16xf32> to vector<1x16xf32>
    %61 = vector.shape_cast %57 : vector<1x16xf32> to vector<1x1x16xf32>
    tpu.vector_store %arg6[%58, %c0_26, %c0_27], %61 {strides = array<i32>} : memref<1x1x16xf32, #tpu.memory_space<vmem>>, vector<1x1x16xf32>,
    %c0_i32_28 = arith.constant 0 : i32
    %62 = arith.cmpi eq, %arg1, %c0_i32_28 : i32
    %63 = arith.extui %62 : i1 to i32
    %c0_i32_29 = arith.constant 0 : i32
    %64 = arith.cmpi ne, %63, %c0_i32_29 : i32
    scf.if %64 {
      %c0_35 = arith.constant 0 : index
      %c0_36 = arith.constant 0 : index
      %73 = vector.load %arg5[%c0_35, %c0_36] : memref<8x1xf32, #tpu.memory_space<vmem>>, vector<8x1xf32>
      %cst_37 = arith.constant 0.000000e+00 : f32
      %74 = vector.broadcast %cst_37 : f32 to vector<8x1xf32>
      %75 = arith.maximumf %73, %74 : vector<8x1xf32>
      %76 = math.sqrt %75 : vector<8x1xf32>
      %cst_38 = arith.constant 0.000000e+00 : f32
      %77 = vector.broadcast %cst_38 : f32 to vector<8x1xf32>
      %78 = arith.select %30, %76, %77 : vector<8x1xi1>, vector<8x1xf32>
      %c0_39 = arith.constant 0 : index
      %c0_40 = arith.constant 0 : index
      %79 = vector.load %arg7[%c0_39, %c0_40] : memref<1x1xf32, #tpu.memory_space<vmem>>, vector<1x1xf32>
      %80 = vector.shape_cast %78 : vector<8x1xf32> to vector<1x8x1xf32>
      %cst_41 = arith.constant dense<0.000000e+00> : vector<1xf32>
      %81 = vector.multi_reduction <add>, %80, %cst_41 [1, 2] : vector<1x8x1xf32> to vector<1xf32>
      %82 = vector.shape_cast %81 : vector<1xf32> to vector<1x1x1xf32>
      %83 = vector.extract %82[0, 0, 0] : f32 from vector<1x1x1xf32>
      %84 = vector.broadcast %83 : f32 to vector<1x1xf32>
      %85 = arith.addf %79, %84 : vector<1x1xf32>
      %c0_42 = arith.constant 0 : index
      %c0_43 = arith.constant 0 : index
      %86 = vector.load %arg7[%c0_42, %c0_43] : memref<1x1xf32, #tpu.memory_space<vmem>>, vector<1x1xf32>
      tpu.vector_store %arg7[%c0_42, %c0_43], %85 {strides = array<i32>} : memref<1x1xf32, #tpu.memory_space<vmem>>, vector<1x1xf32>,
    } else {
    }
    %c0_i32_30 = arith.constant 0 : i32
    %65 = arith.cmpi eq, %arg0, %c0_i32_30 : i32
    %66 = arith.extui %65 : i1 to i32
    %c0_i32_31 = arith.constant 0 : i32
    %67 = arith.cmpi ne, %66, %c0_i32_31 : i32
    scf.if %67 {
      %73 = arith.index_cast %arg1 : i32 to index
      %c0_35 = arith.constant 0 : index
      %c0_36 = arith.constant 0 : index
      %74 = vector.load %arg6[%73, %c0_35, %c0_36] : memref<1x1x16xf32, #tpu.memory_space<vmem>>, vector<1x1x16xf32>
      %75 = vector.shape_cast %74 : vector<1x1x16xf32> to vector<1x16xf32>
      %cst_37 = arith.constant 0.000000e+00 : f32
      %76 = vector.broadcast %cst_37 : f32 to vector<1x16xf32>
      %77 = arith.maximumf %75, %76 : vector<1x16xf32>
      %78 = math.sqrt %77 : vector<1x16xf32>
      %cst_38 = arith.constant 0.000000e+00 : f32
      %79 = vector.broadcast %cst_38 : f32 to vector<1x16xf32>
      %80 = arith.select %32, %78, %79 : vector<1x16xi1>, vector<1x16xf32>
      %c0_39 = arith.constant 0 : index
      %c0_40 = arith.constant 0 : index
      %81 = vector.load %arg8[%c0_39, %c0_40] : memref<1x1xf32, #tpu.memory_space<vmem>>, vector<1x1xf32>
      %82 = vector.shape_cast %80 : vector<1x16xf32> to vector<1x1x16xf32>
      %cst_41 = arith.constant dense<0.000000e+00> : vector<1xf32>
      %83 = vector.multi_reduction <add>, %82, %cst_41 [1, 2] : vector<1x1x16xf32> to vector<1xf32>
      %84 = vector.shape_cast %83 : vector<1xf32> to vector<1x1x1xf32>
      %85 = vector.extract %84[0, 0, 0] : f32 from vector<1x1x1xf32>
      %86 = vector.broadcast %85 : f32 to vector<1x1xf32>
      %87 = arith.addf %81, %86 : vector<1x1xf32>
      %c0_42 = arith.constant 0 : index
      %c0_43 = arith.constant 0 : index
      %88 = vector.load %arg8[%c0_42, %c0_43] : memref<1x1xf32, #tpu.memory_space<vmem>>, vector<1x1xf32>
      tpu.vector_store %arg8[%c0_42, %c0_43], %87 {strides = array<i32>} : memref<1x1xf32, #tpu.memory_space<vmem>>, vector<1x1xf32>,
    } else {
    }
    %c0_i32_32 = arith.constant 0 : i32
    %68 = arith.cmpi eq, %arg0, %c0_i32_32 : i32
    %c0_i32_33 = arith.constant 0 : i32
    %69 = arith.cmpi eq, %arg1, %c0_i32_33 : i32
    %70 = arith.andi %68, %69 : i1
    %71 = arith.extui %70 : i1 to i32
    %c0_i32_34 = arith.constant 0 : i32
    %72 = arith.cmpi ne, %71, %c0_i32_34 : i32
    scf.if %72 {
      %c0_35 = arith.constant 0 : index
      %c0_36 = arith.constant 0 : index
      %73 = vector.load %arg7[%c0_35, %c0_36] : memref<1x1xf32, #tpu.memory_space<vmem>>, vector<1x1xf32>
      %cst_37 = arith.constant 1.250000e-01 : f32
      %74 = vector.broadcast %cst_37 : f32 to vector<1x1xf32>
      %75 = arith.mulf %73, %74 : vector<1x1xf32>
      %c0_38 = arith.constant 0 : index
      %c0_39 = arith.constant 0 : index
      %76 = vector.load %arg8[%c0_38, %c0_39] : memref<1x1xf32, #tpu.memory_space<vmem>>, vector<1x1xf32>
      %cst_40 = arith.constant 6.250000e-02 : f32
      %77 = vector.broadcast %cst_40 : f32 to vector<1x1xf32>
      %78 = arith.mulf %76, %77 : vector<1x1xf32>
      %79 = arith.addf %75, %78 : vector<1x1xf32>
      %c0_41 = arith.constant 0 : index
      %c0_42 = arith.constant 0 : index
      %80 = vector.load %arg4[%c0_41, %c0_42] : memref<1x1xf32, #tpu.memory_space<vmem>>, vector<1x1xf32>
      tpu.vector_store %arg4[%c0_41, %c0_42], %79 {strides = array<i32>} : memref<1x1xf32, #tpu.memory_space<vmem>>, vector<1x1xf32>,
    } else {
    }
    return
  }
  func.func @transform_0(%arg0: i32, %arg1: i32) -> (i32, i32) {
    %c0_i32 = arith.constant 0 : i32
    %c0_i32_0 = arith.constant 0 : i32
    return %arg0, %c0_i32 : i32, i32
  }
  func.func @transform_1(%arg0: i32, %arg1: i32) -> (i32, i32) {
    %c0_i32 = arith.constant 0 : i32
    %c0_i32_0 = arith.constant 0 : i32
    return %arg1, %c0_i32 : i32, i32
  }
  func.func @transform_2(%arg0: i32, %arg1: i32) -> (i32, i32) {
    %c0_i32 = arith.constant 0 : i32
    %c0_i32_0 = arith.constant 0 : i32
    %c0_i32_1 = arith.constant 0 : i32
    return %c0_i32, %c0_i32_0 : i32, i32
  }
}

</mosaic_0001>

<llo_original>
// kernel: tpu_custom_call.1
$region0: #{tpu_custom_call.1}
  #allocation0 [shape = 'u32[]', space=smem, size = 0x4, offset = 0x4, fixed_abs, tag = 'smem constant byte address 0x4 - core index']
  #allocation1 [shape = 'u32[72,128]{1,0:T(1,128)}', space=vmem, size = 0x9000, scoped, tag = 'internal scratch']
  #allocation2 [shape = 'f32[8,1]{1,0:T(8,128)}', space=vmem, size = 0x1000, scoped, tag = 'scratch operand']
  #allocation3 [shape = 'f32[1,1,16]{2,1,0:T(1,128)}', space=vmem, size = 0x200, scoped, tag = 'scratch operand']
  #allocation4 [shape = 'f32[1,1]{1,0:T(1,128)}', space=vmem, size = 0x200, scoped, tag = 'scratch operand']
  #allocation5 [shape = 'f32[1,1]{1,0:T(1,128)}', space=vmem, size = 0x200, scoped, tag = 'scratch operand']
  %s0 = inlined_call_operand.hbm [shape: f32[8,128], index: 0, kind: input, shape index: {}]
  %s1 = inlined_call_operand.hbm [shape: f32[16,128], index: 1, kind: input, shape index: {}]
  %s2 = inlined_call_operand.hbm [shape: f32[1,1], index: 2, kind: output, shape index: {}]
  %s3 = sld [smem:[#allocation0]]
  $region50: #{tpu_custom_call.1} parent=0
    _
  %s5 = ssub.s32 1, %s3
  %s6 = scalar_select 0, %s5, %s3
  $region1: #{tpu_custom_call.1} parent=0
    #allocation6 [shape = 'u8[4096]{0}', space=vmem, size = 0x1000, scoped, tag = 'input window, operand 0, single buffered']
    #allocation7 [shape = 's32[1]{0}', space=sflag, size = 0x4, scoped, tag = 'scoped memory for tpu_custom_call.1']
    #allocation8 [shape = 's32[1]{0}', space=sflag, size = 0x4, scoped, tag = 'scoped memory for tpu_custom_call.1']
    #allocation9 [shape = 'u8[8192]{0}', space=vmem, size = 0x2000, scoped, tag = 'input window, operand 1, single buffered']
    #allocation10 [shape = 's32[1]{0}', space=sflag, size = 0x4, scoped, tag = 'scoped memory for tpu_custom_call.1']
    #allocation11 [shape = 'u8[512]{0}', space=vmem, size = 0x400, scoped, tag = 'output window, operand 0, single buffered']
    %7 = vsyncpa [#allocation7], 0
    %8 = vsyncpa [#allocation10], 0
    %9 = vsyncpa [#allocation8], 0
    // Predicated region
    $region2: #{tpu_custom_call.1} parent=1 // pred_check
      _
    $region3: #{tpu_custom_call.1} parent=1 // pred_check_branch
      %11 = sbr.rel (0) target = $region5
    $region4: #{tpu_custom_call.1} parent=1 // pred_region
      %13 = vsyncadd [#allocation7], 0
      %s15 = sshll.u32 %s0, 4
      %s16 = int_to_ptr.hbm [resolvable:$true] %s15
      %s17 = sshll.u32 [#allocation6], 4
      %s18 = int_to_ptr.vmem [resolvable:$true] %s17
      %20 = dma.hbm_to_vmem [thread:$0]  %s16, 128, %s18, [#allocation7]
    $region5: #{tpu_custom_call.1} parent=1 // pred_fallthru
      _
    // Predicated region
    $region6: #{tpu_custom_call.1} parent=1 // pred_check
      _
    $region7: #{tpu_custom_call.1} parent=1 // pred_check_branch
      %22 = sbr.rel (0) target = $region9
    $region8: #{tpu_custom_call.1} parent=1 // pred_region
      %24 = vsyncadd [#allocation10], 0
      %s25 = sshll.u32 %s1, 4
      %s26 = int_to_ptr.hbm [resolvable:$true] %s25
      %s27 = sshll.u32 [#allocation9], 4
      %s28 = int_to_ptr.vmem [resolvable:$true] %s27
      %33 = dma.hbm_to_vmem [thread:$0]  %s26, 256, %s28, [#allocation10], 128, 128, 8
    $region9: #{tpu_custom_call.1} parent=1 // pred_fallthru
      _
    // Predicated region
    $region10: #{tpu_custom_call.1} parent=1 // pred_check
      _
    $region11: #{tpu_custom_call.1} parent=1 // pred_check_branch
      %35 = sbr.rel (0) target = $region13
    $region12: #{tpu_custom_call.1} parent=1 // pred_region
      %37 = dma.done [#allocation7], 128
    $region13: #{tpu_custom_call.1} parent=1 // pred_fallthru
      _
    // Predicated region
    $region14: #{tpu_custom_call.1} parent=1 // pred_check
      _
    $region15: #{tpu_custom_call.1} parent=1 // pred_check_branch
      %39 = sbr.rel (0) target = $region17
    $region16: #{tpu_custom_call.1} parent=1 // pred_region
      %41 = dma.done [#allocation10], 256
    $region17: #{tpu_custom_call.1} parent=1 // pred_fallthru
      _
    %p42 = scmp.eq.s32.totalorder 0, 0
    %p43 = scmp.eq.s32.totalorder 0, 0
    %p44 = pnand %p42, %p43
    %p45 = pneg %p44
    // Predicated region
    $region18: #{tpu_custom_call.1} parent=1 // pred_check
      _
    $region19: #{tpu_custom_call.1} parent=1 // pred_check_branch
      %47 = sbr.rel (%p44) target = $region21
    $region20: #{tpu_custom_call.1} parent=1 // pred_region
      %vm48 = vcmask 0
      %49 = vst.msk [vmem:[#allocation4] sm:$0x1] %vm48, 0.0
      %50 = vst.msk [vmem:[#allocation5] sm:$0x1] %vm48, 0.0
    $region21: #{tpu_custom_call.1} parent=1 // pred_fallthru
      _
    %v51 = vld [vmem:[#allocation6] sm:$0xff]
    %v52 = vld [vmem:[#allocation9] sm:$0xff]
    %v53 = vld [vmem:[#allocation9 + $0x8] sm:$0xff]
    %v54 = vmul.f32 %v51, %v51
    %55 = vadd.xlane.f32.xlu0 %v54
    %v56 = vpop.xlane.xlu0 %55
    %v57 = vmul.f32 %v52, %v52
    %v58 = vmul.f32 %v53, %v53
    %59 = vadd.xlane.f32.xlu0 %v57
    %v60 = vpop.xlane.xlu0 %59
    %61 = vadd.xlane.f32.xlu0 %v58
    %v62 = vpop.xlane.xlu0 %61
    %63 = vmatpush.xpose.msra.mxu0 0.0
    %64 = vmatpush.xpose.msra.mxu0 0.0
    %65 = vmatpush.xpose.msra.mxu0 0.0
    %66 = vmatpush.xpose.msra.mxu0 0.0
    %67 = vmatpush.xpose.msra.mxu0 0.0
    %68 = vmatpush.xpose.msra.mxu0 0.0
    %69 = vmatpush.xpose.msra.mxu0 0.0
    %70 = vmatpush.xpose.msra.mxu0 0.0
    %71 = vmatpush.xpose.msra.mxu0 0.0
    %72 = vmatpush.xpose.msra.mxu0 0.0
    %73 = vmatpush.xpose.msra.mxu0 0.0
    %74 = vmatpush.xpose.msra.mxu0 0.0
    %75 = vmatpush.xpose.msra.mxu0 0.0
    %76 = vmatpush.xpose.msra.mxu0 0.0
    %77 = vmatpush.xpose.msra.mxu0 %v53
    %78 = vmatpush.xpose.msra.mxu0 %v52
    %79 = vmatmul.f32.gmra.mxu0 %v51
    %v80 = vpop.f32.mrf.mxu0
    %v81 = vadd.f32 0.0, %v80
    %82 = vdwg.mxu0
    %83 = vxpose.xlu0.b32.start [1/16] %v60, 128
    %84 = vxpose.xlu0.b32.cont [2/16] %v62, 128
    %85 = vxpose.xlu0.b32.cont [3/16] 0.0, 128
    %86 = vxpose.xlu0.b32.cont [4/16] 0.0, 128
    %87 = vxpose.xlu0.b32.cont [5/16] 0.0, 128
    %88 = vxpose.xlu0.b32.cont [6/16] 0.0, 128
    %89 = vxpose.xlu0.b32.cont [7/16] 0.0, 128
    %90 = vxpose.xlu0.b32.cont [8/16] 0.0, 128
    %91 = vxpose.xlu0.b32.cont [9/16] 0.0, 128
    %92 = vxpose.xlu0.b32.cont [10/16] 0.0, 128
    %93 = vxpose.xlu0.b32.cont [11/16] 0.0, 128
    %94 = vxpose.xlu0.b32.cont [12/16] 0.0, 128
    %95 = vxpose.xlu0.b32.cont [13/16] 0.0, 128
    %96 = vxpose.xlu0.b32.cont [14/16] 0.0, 128
    %97 = vxpose.xlu0.b32.cont [15/16] 0.0, 128
    %98 = vxpose.xlu0.b32.end [16/16] 0.0, 128
    %v99 = vpop.trf.xlu0
    %v100 = vpop.trf.xlu0
    %v101 = vpop.trf.xlu0
    %v102 = vpop.trf.xlu0
    %v103 = vpop.trf.xlu0
    %v104 = vpop.trf.xlu0
    %v105 = vpop.trf.xlu0
    %v106 = vpop.trf.xlu0
    %v107 = vpop.trf.xlu0
    %v108 = vpop.trf.xlu0
    %v109 = vpop.trf.xlu0
    %v110 = vpop.trf.xlu0
    %v111 = vpop.trf.xlu0
    %v112 = vpop.trf.xlu0
    %v113 = vpop.trf.xlu0
    %v114 = vpop.trf.xlu0
    %v115 = vperm.slane %v99, 0
    %v116 = vadd.f32 %v56, %v115
    %v117 = vmul.f32 %v81, 2.0
    %v118 = vsub.f32 %v116, %v117
    %v119 = vlaneseq
    %v120 = vshrl.u32 %v119, 7
    %s121 = smul.u32 0, 8
    %v122 = vstv %s121
    %v123 = vadd.s32 %v120, %v122
    %v124 = vlaneseq
    %v125 = vand.u32 %v124, 127
    %s126 = smul.u32 0, 16
    %v127 = vstv %s126
    %v128 = vadd.s32 %v125, %v127
    %vm129 = vcmp.lt.s32.totalorder %v123, 8
    %vm130 = vcmp.lt.s32.totalorder %v128, 16
    %v131 = vsel %vm130, 1, 0
    %vm132 = vcmp.eq.s32.totalorder %v131, 1
    %v133 = vsel %vm132, %v118, inf
    %vm134 = vcmask 130048
    %v135 = vsel %vm134, %v133, inf
    %136 = vmin.xlane.f32.xlu0 %v135
    %v137 = vpop.xlane.xlu0 %136
    %v138 = vsel %vm129, 1, 0
    %vm139 = vcmp.eq.s32.totalorder %v138, 1
    %v140 = vsel %vm139, %v118, inf
    %v141 = vsel %vm134, %v140, inf
    %v142 = vrot.slane %v141, 4
    %v143 = vmin.f32 %v141, %v142
    %v144 = vrot.slane %v143, 2
    %v145 = vmin.f32 %v143, %v144
    %v146 = vrot.slane %v145, 1
    %v147 = vmin.f32 %v145, %v146
    // Predicated region
    $region22: #{tpu_custom_call.1} parent=1 // pred_check
      %p148 = pneg %p43
    $region23: #{tpu_custom_call.1} parent=1 // pred_check_branch
      %150 = sbr.rel (%p148) target = $region25
    $region24: #{tpu_custom_call.1} parent=1 // pred_region
      %vm151 = vcmask 7168
      %152 = vst.msk [vmem:[#allocation2] sm:$0xff] %vm151, inf
    $region25: #{tpu_custom_call.1} parent=1 // pred_fallthru
      _
    %v153 = vld [vmem:[#allocation2] sm:$0xff]
    %v154 = vmin.f32 %v153, %v137
    %vm155 = vcmask 7168
    %156 = vst.msk [vmem:[#allocation2] sm:$0xff] %vm155, %v154
    // Predicated region
    $region26: #{tpu_custom_call.1} parent=1 // pred_check
      %p157 = pneg %p42
    $region27: #{tpu_custom_call.1} parent=1 // pred_check_branch
      %159 = sbr.rel (%p157) target = $region29
    $region28: #{tpu_custom_call.1} parent=1 // pred_region
      %vm160 = vcmask 122880
      %161 = vst.msk [vmem:[#allocation3] sm:$0x1] %vm160, inf
    $region29: #{tpu_custom_call.1} parent=1 // pred_fallthru
      _
    %v162 = vld [vmem:[#allocation3] sm:$0x1]
    %v163 = vmin.f32 %v162, %v147
    %vm164 = vcmask 122880
    %165 = vst.msk [vmem:[#allocation3] sm:$0x1] %vm164, %v163
    // Predicated region
    $region30: #{tpu_custom_call.1} parent=1 // pred_check
      %p166 = pneg %p43
    $region31: #{tpu_custom_call.1} parent=1 // pred_check_branch
      %168 = sbr.rel (%p166) target = $region33
    $region32: #{tpu_custom_call.1} parent=1 // pred_region
      %v169 = vld [vmem:[#allocation2] sm:$0xff]
      %v170 = vmax.f32 %v169, 0.0
      %v171 = vrsqrt.pop %v170
      %v172 = vmul.f32 %v171, %v170
      %v173 = vmul.f32 %v172, %v171
      %v174 = vmul.f32 0.5, %v173
      %v175 = vsub.f32 1.5, %v174
      %v176 = vmul.f32 %v171, %v175
      %v177 = vmul.f32 %v170, %v176
      %vm178 = vcmp.eq.f32.partialorder %v170, inf
      %v179 = vsel %vm178, %v170, %v177
      %vm180 = vcmp.eq.f32.partialorder %v170, 0.0
      %v181 = vand.u32 %v170, 2147483648
      %v182 = vsel %vm180, %v181, %v179
      %v183 = vsel %vm129, %v182, 0.0
      %v184 = vld [vmem:[#allocation4] sm:$0x1]
      %v185 = vsel %vm155, %v183, 0.0
      %186 = vadd.xlane.f32.xlu0 %v185
      %v187 = vpop.xlane.xlu0 %186
      %v188 = vrot.slane %v187, 4
      %v189 = vadd.f32 %v187, %v188
      %v190 = vrot.slane %v189, 2
      %v191 = vadd.f32 %v189, %v190
      %v192 = vrot.slane %v191, 1
      %v193 = vadd.f32 %v191, %v192
      %s194 = vtos %v193
      %v195 = vstv %s194
      %v196 = vadd.f32 %v184, %v195
      %vm197 = vcmask 0
      %198 = vst.msk [vmem:[#allocation4] sm:$0x1] %vm197, %v196
    $region33: #{tpu_custom_call.1} parent=1 // pred_fallthru
      _
    // Predicated region
    $region34: #{tpu_custom_call.1} parent=1 // pred_check
      %p199 = pneg %p42
    $region35: #{tpu_custom_call.1} parent=1 // pred_check_branch
      %201 = sbr.rel (%p199) target = $region37
    $region36: #{tpu_custom_call.1} parent=1 // pred_region
      %v202 = vld [vmem:[#allocation3] sm:$0x1]
      %v203 = vmax.f32 %v202, 0.0
      %v204 = vrsqrt.pop %v203
      %v205 = vmul.f32 %v204, %v203
      %v206 = vmul.f32 %v205, %v204
      %v207 = vmul.f32 0.5, %v206
      %v208 = vsub.f32 1.5, %v207
      %v209 = vmul.f32 %v204, %v208
      %v210 = vmul.f32 %v203, %v209
      %vm211 = vcmp.eq.f32.partialorder %v203, inf
      %v212 = vsel %vm211, %v203, %v210
      %vm213 = vcmp.eq.f32.partialorder %v203, 0.0
      %v214 = vand.u32 %v203, 2147483648
      %v215 = vsel %vm213, %v214, %v212
      %v216 = vsel %vm130, %v215, 0.0
      %v217 = vld [vmem:[#allocation5] sm:$0x1]
      %v218 = vsel %vm164, %v216, 0.0
      %219 = vadd.xlane.f32.xlu0 %v218
      %v220 = vpop.xlane.xlu0 %219
      %v221 = vrot.slane %v220, 4
      %v222 = vadd.f32 %v220, %v221
      %v223 = vrot.slane %v222, 2
      %v224 = vadd.f32 %v222, %v223
      %v225 = vrot.slane %v224, 1
      %v226 = vadd.f32 %v224, %v225
      %s227 = vtos %v226
      %v228 = vstv %s227
      %v229 = vadd.f32 %v217, %v228
      %vm230 = vcmask 0
      %231 = vst.msk [vmem:[#allocation5] sm:$0x1] %vm230, %v229
    $region37: #{tpu_custom_call.1} parent=1 // pred_fallthru
      _
    // Predicated region
    $region38: #{tpu_custom_call.1} parent=1 // pred_check
      _
    $region39: #{tpu_custom_call.1} parent=1 // pred_check_branch
      %233 = sbr.rel (%p44) target = $region41
    $region40: #{tpu_custom_call.1} parent=1 // pred_region
      %v234 = vld [vmem:[#allocation4] sm:$0x1]
      %v235 = vmul.f32 %v234, 0.125
      %v236 = vld [vmem:[#allocation5] sm:$0x1]
      %v237 = vmul.f32 %v236, 0.0625
      %v238 = vadd.f32 %v235, %v237
      %vm239 = vcmask 0
      %240 = vst.msk [vmem:[#allocation11] sm:$0x1] %vm239, %v238
    $region41: #{tpu_custom_call.1} parent=1 // pred_fallthru
      _
    // Predicated region
    $region42: #{tpu_custom_call.1} parent=1 // pred_check
      _
    $region43: #{tpu_custom_call.1} parent=1 // pred_check_branch
      %242 = sbr.rel (0) target = $region45
    $region44: #{tpu_custom_call.1} parent=1 // pred_region
      %244 = vsyncadd [#allocation8], 0
      %s246 = sshll.u32 [#allocation11], 4
      %s247 = int_to_ptr.vmem [resolvable:$true] %s246
      %s248 = sshll.u32 %s2, 4
      %s249 = int_to_ptr.hbm [resolvable:$true] %s248
      %251 = dma.vmem_to_hbm [thread:$0]  %s247, 16, %s249, [#allocation8]
    $region45: #{tpu_custom_call.1} parent=1 // pred_fallthru
      _
    // Predicated region
    $region46: #{tpu_custom_call.1} parent=1 // pred_check
      _
    $region47: #{tpu_custom_call.1} parent=1 // pred_check_branch
      %253 = sbr.rel (0) target = $region49
    $region48: #{tpu_custom_call.1} parent=1 // pred_region
      %255 = dma.done [#allocation8], 16
    $region49: #{tpu_custom_call.1} parent=1 // pred_fallthru
      _
    %256 = vsyncpa [#allocation7], 1
    %257 = vsyncpa [#allocation10], 1
    %258 = vsyncpa [#allocation8], 1

</llo_original>
